<compile_context>
chip_gen: v6e
topology: v6e:2x2x1
jax: 0.10.0
libtpu: 0.0.40
codegen_flags: <defaults>
</compile_context>

<pallas_src>
import jax
import jax.numpy as jnp
from jax.experimental import pallas as pl
from jax.experimental.pallas import tpu as pltpu


def _norm_kernel(g_ref, o_ref):
    # g_ref / o_ref: (TR, N) row-tile in VMEM. Each row is one adjacency row,
    # so the degree reduction (last axis) stays fully inside the block.
    g = g_ref[...]
    gf = g.astype(jnp.float32)
    deg = jnp.sum(gf, axis=-1, keepdims=True)       # (TR, 1) f32 accumulate
    inv = 1.0 / deg                                 # may produce inf/nan (zero rows)
    inv = jnp.where(jnp.isfinite(inv), inv, 0.0)    # remove_nan_inf
    # bmm(diag_embed(inv), g) == broadcasted row-wise scale (keep off the MXU).
    o_ref[...] = (gf * inv).astype(o_ref.dtype)


def _pick_row_tile(num_rows: int, n_cols: int, itemsize: int) -> int:
    """Row-tile: multiple of sublane packing, ~4 MiB per tile, capped at num_rows.

    ~4 MiB/tile -> ~16 MiB resident (2x double-buffered input + output), which
    fits the scoped-VMEM budget on v5e/v6e/v7x with headroom.
    """
    sublane = max(8, 32 // itemsize)        # 8 for f32, 16 for bf16, 32 for int8
    target_bytes = 4 << 20
    tr = (target_bytes // max(1, n_cols * itemsize)) // sublane * sublane
    tr = max(sublane, tr)
    if tr >= num_rows:
        return num_rows                     # full extent is always a legal block dim
    return tr


@jax.jit
def normalize_one(graph: jax.Array) -> jax.Array:
    """D^{-1} A row-normalization of a batched adjacency tensor [B, N, N]."""
    B, N, N2 = graph.shape
    assert N == N2, "adjacency matrices must be square"
    dtype = graph.dtype
    itemsize = jnp.dtype(dtype).itemsize

    # Rows are independent -> flatten to (B*N, N) and tile rows.
    R = B * N
    x = graph.reshape(R, N)
    tr = _pick_row_tile(R, N, itemsize)

    out = pl.pallas_call(
        _norm_kernel,
        out_shape=jax.ShapeDtypeStruct((R, N), dtype),
        grid_spec=pltpu.PrefetchScalarGridSpec(
            num_scalar_prefetch=0,
            grid=(pl.cdiv(R, tr),),
            in_specs=[pl.BlockSpec((tr, N), lambda i: (i, 0))],
            out_specs=pl.BlockSpec((tr, N), lambda i: (i, 0)),
        ),
        compiler_params=pltpu.CompilerParams(
            # Row tiles are independent -> megacore-shardable on v7x; harmless
            # on single-TC v5e/v6e.
            dimension_semantics=("parallel",),
            # Lift v5e (16 MiB) / v6e (32 MiB) default scoped limits while
            # staying well under v7x's 64 MiB physical VMEM.
            vmem_limit_bytes=48 << 20,
        ),
    )(x)
    return out.reshape(B, N, N)


def normalizer_forward(adj_list):
    """Mirror of Normalizer.forward: list of batched graphs -> list of normed graphs."""
    if len(adj_list) > 1 and all(
        a.shape == adj_list[0].shape and a.dtype == adj_list[0].dtype
        for a in adj_list
    ):
        # Same shape/dtype: stack into one pallas_call to avoid per-graph
        # dispatch and give the DMA pipeline one long contiguous stream.
        stacked = jnp.stack(adj_list, axis=0)            # (L, B, N, N)
        L, B, N, _ = stacked.shape
        out = normalize_one(stacked.reshape(L * B, N, N)).reshape(L, B, N, N)
        return [out[i] for i in range(L)]
    return [normalize_one(a) for a in adj_list]


def _reference_norm(graph):
    deg = jnp.sum(graph, axis=2)
    inv = 1.0 / deg
    inv = jnp.where(jnp.isfinite(inv), inv, 0.0)
    d = jax.vmap(jnp.diag)(inv)
    return jnp.einsum("bij,bjk->bik", d, graph)


if __name__ == "__main__":
    key = jax.random.PRNGKey(0)
    k1, k2, k3 = jax.random.split(key, 3)

    # Two same-shape graphs (stacked single-call path) ...
    B, N = 2, 16
    g1 = (jax.random.uniform(k1, (B, N, N)) > 0.5).astype(jnp.float32)
    g2 = (jax.random.uniform(k2, (B, N, N)) > 0.5).astype(jnp.float32)
    # Force a few all-zero rows to exercise the remove_nan_inf path.
    g1 = g1.at[:, 0, :].set(0.0)
    g2 = g2.at[:, 3, :].set(0.0)
    adj = [g1, g2]

    outs = normalizer_forward(adj)
    outs = [jax.block_until_ready(o) for o in outs]
    for o, g in zip(outs, adj):
        ref = _reference_norm(g)
        assert jnp.allclose(o, ref, atol=1e-5, rtol=1e-5), "mismatch vs reference"

    # ... and one graph of a different shape (per-graph fallback path).
    g3 = (jax.random.uniform(k3, (2, 64, 64)) > 0.5).astype(jnp.float32)
    g3 = g3.at[:, 5, :].set(0.0)
    (o3,) = normalizer_forward([g3])
    o3 = jax.block_until_ready(o3)
    assert jnp.allclose(o3, _reference_norm(g3), atol=1e-5, rtol=1e-5), "mismatch vs reference"

    print("KERNEL_OK")
</pallas_src>

<mosaic_0001>
module attributes {stable_mosaic.version = 11 : i64} {
  func.func @_norm_kernel(%arg0: i32, %arg1: memref<64x16xf32, #tpu.memory_space<vmem>>, %arg2: memref<64x16xf32, #tpu.memory_space<vmem>>) attributes {dimension_semantics = [#tpu.dimension_semantics<parallel>], iteration_bounds = array<i64: 1>, scalar_prefetch = 0 : i64, scratch_operands = 0 : i64, tpu.core_type = #tpu.core_type<tc>, window_params = [{transform_indices = @transform_0, window_bounds = array<i64: 64, 16>}, {transform_indices = @transform_1, window_bounds = array<i64: 64, 16>}]} {
    %c0 = arith.constant 0 : index
    %c0_0 = arith.constant 0 : index
    %0 = vector.load %arg1[%c0, %c0_0] : memref<64x16xf32, #tpu.memory_space<vmem>>, vector<64x16xf32>
    %cst = arith.constant dense<0.000000e+00> : vector<64xf32>
    %1 = vector.multi_reduction <add>, %0, %cst [1] : vector<64x16xf32> to vector<64xf32>
    %2 = vector.shape_cast %1 : vector<64xf32> to vector<64x1xf32>
    %cst_1 = arith.constant 1.000000e+00 : f32
    %3 = vector.broadcast %cst_1 : f32 to vector<64x1xf32>
    %4 = arith.divf %3, %2 : vector<64x1xf32>
    %5 = tpu.weird %4 : vector<64x1xf32> -> vector<64x1xi1>
    %cst_2 = arith.constant dense<true> : vector<64x1xi1>
    %6 = arith.xori %5, %cst_2 : vector<64x1xi1>
    %cst_3 = arith.constant 0.000000e+00 : f32
    %7 = vector.broadcast %cst_3 : f32 to vector<64x1xf32>
    %8 = arith.select %6, %4, %7 : vector<64x1xi1>, vector<64x1xf32>
    %9 = vector.broadcast %8 : vector<64x1xf32> to vector<64x16xf32>
    %10 = arith.mulf %0, %9 : vector<64x16xf32>
    %c0_4 = arith.constant 0 : index
    %c0_5 = arith.constant 0 : index
    %11 = vector.load %arg2[%c0_4, %c0_5] : memref<64x16xf32, #tpu.memory_space<vmem>>, vector<64x16xf32>
    tpu.vector_store %arg2[%c0_4, %c0_5], %10 {strides = array<i32>} : memref<64x16xf32, #tpu.memory_space<vmem>>, vector<64x16xf32>,
    return
  }
  func.func @transform_0(%arg0: i32) -> (i32, i32) {
    %c0_i32 = arith.constant 0 : i32
    %c0_i32_0 = arith.constant 0 : i32
    return %arg0, %c0_i32 : i32, i32
  }
  func.func @transform_1(%arg0: i32) -> (i32, i32) {
    %c0_i32 = arith.constant 0 : i32
    %c0_i32_0 = arith.constant 0 : i32
    return %arg0, %c0_i32 : i32, i32
  }
}

</mosaic_0001>

<llo_original>
// kernel: normalize_one.1
$region0: #{normalize_one.1}
  #allocation0 [shape = 'u32[]', space=smem, size = 0x4, offset = 0x4, fixed_abs, tag = 'smem constant byte address 0x4 - core index']
  #allocation1 [shape = 'u32[144,128]{1,0:T(1,128)}', space=vmem, size = 0x12000, scoped, tag = 'internal scratch']
  %s0 = inlined_call_operand.hbm [shape: f32[64,16], index: 0, kind: input, shape index: {}]
  %s1 = inlined_call_operand.hbm [shape: f32[64,16], index: 1, kind: output, shape index: {}]
  %s2 = sld [smem:[#allocation0]]
  $region18: #{normalize_one.1} parent=0
    _
  %s4 = ssub.s32 1, %s2
  %s5 = scalar_select 0, %s4, %s2
  $region1: #{normalize_one.1} parent=0
    #allocation2 [shape = 'u8[32768]{0}', space=vmem, size = 0x8000, scoped, tag = 'input window, operand 0, single buffered']
    #allocation3 [shape = 's32[1]{0}', space=sflag, size = 0x4, scoped, tag = 'scoped memory for normalize_one.1']
    #allocation4 [shape = 's32[1]{0}', space=sflag, size = 0x4, scoped, tag = 'scoped memory for normalize_one.1']
    #allocation5 [shape = 'u8[32768]{0}', space=vmem, size = 0x8000, scoped, tag = 'output window, operand 0, single buffered']
    %6 = vsyncpa [#allocation3], 0
    %7 = vsyncpa [#allocation4], 0
    // Predicated region
    $region2: #{normalize_one.1} parent=1 // pred_check
      _
    $region3: #{normalize_one.1} parent=1 // pred_check_branch
      %9 = sbr.rel (0) target = $region5
    $region4: #{normalize_one.1} parent=1 // pred_region
      %s11 = ssub.s32 1024, 1024
      %12 = vsyncadd [#allocation3], %s11
      %s13 = sshll.u32 [#allocation2], 4
      %s14 = int_to_ptr.vmem [resolvable:$true] %s13
      %19 = dma.hbm_to_vmem [thread:$0]  %s0, 1024, %s14, [#allocation3], 128, 128, 8
    $region5: #{normalize_one.1} parent=1 // pred_fallthru
      _
    // Predicated region
    $region6: #{normalize_one.1} parent=1 // pred_check
      _
    $region7: #{normalize_one.1} parent=1 // pred_check_branch
      %21 = sbr.rel (0) target = $region9
    $region8: #{normalize_one.1} parent=1 // pred_region
      %22 = dma.done [#allocation3], 1024
    $region9: #{normalize_one.1} parent=1 // pred_fallthru
      _
    %v23 = vld [vmem:[#allocation2] sm:$0xff]
    %v24 = vld [vmem:[#allocation2 + $0x8] sm:$0xff]
    %v25 = vld [vmem:[#allocation2 + $0x10] sm:$0xff]
    %v26 = vld [vmem:[#allocation2 + $0x18] sm:$0xff]
    %v27 = vld [vmem:[#allocation2 + $0x20] sm:$0xff]
    %v28 = vld [vmem:[#allocation2 + $0x28] sm:$0xff]
    %v29 = vld [vmem:[#allocation2 + $0x30] sm:$0xff]
    %v30 = vld [vmem:[#allocation2 + $0x38] sm:$0xff]
    %vm31 = vcmask 130048
    %v32 = vsel %vm31, %v23, 0.0
    %33 = vadd.xlane.f32.xlu0 %v32
    %v34 = vpop.xlane.xlu0 %33
    %v35 = vsel %vm31, %v24, 0.0
    %36 = vadd.xlane.f32.xlu0 %v35
    %v37 = vpop.xlane.xlu0 %36
    %v38 = vsel %vm31, %v25, 0.0
    %39 = vadd.xlane.f32.xlu0 %v38
    %v40 = vpop.xlane.xlu0 %39
    %v41 = vsel %vm31, %v26, 0.0
    %42 = vadd.xlane.f32.xlu0 %v41
    %v43 = vpop.xlane.xlu0 %42
    %v44 = vsel %vm31, %v27, 0.0
    %45 = vadd.xlane.f32.xlu0 %v44
    %v46 = vpop.xlane.xlu0 %45
    %v47 = vsel %vm31, %v28, 0.0
    %48 = vadd.xlane.f32.xlu0 %v47
    %v49 = vpop.xlane.xlu0 %48
    %v50 = vsel %vm31, %v29, 0.0
    %51 = vadd.xlane.f32.xlu0 %v50
    %v52 = vpop.xlane.xlu0 %51
    %v53 = vsel %vm31, %v30, 0.0
    %54 = vadd.xlane.f32.xlu0 %v53
    %v55 = vpop.xlane.xlu0 %54
    %v56 = vrcp.pop %v34
    %v57 = vmul.f32 1.0, %v56
    %v58 = vrcp.pop %v37
    %v59 = vmul.f32 1.0, %v58
    %v60 = vrcp.pop %v40
    %v61 = vmul.f32 1.0, %v60
    %v62 = vrcp.pop %v43
    %v63 = vmul.f32 1.0, %v62
    %v64 = vrcp.pop %v46
    %v65 = vmul.f32 1.0, %v64
    %v66 = vrcp.pop %v49
    %v67 = vmul.f32 1.0, %v66
    %v68 = vrcp.pop %v52
    %v69 = vmul.f32 1.0, %v68
    %v70 = vrcp.pop %v55
    %v71 = vmul.f32 1.0, %v70
    %vm72 = vweird.f32 %v57
    %vm73 = vweird.f32 %v59
    %vm74 = vweird.f32 %v61
    %vm75 = vweird.f32 %v63
    %vm76 = vweird.f32 %v65
    %vm77 = vweird.f32 %v67
    %vm78 = vweird.f32 %v69
    %vm79 = vweird.f32 %v71
    %vm80 = vmxor %vm72, 1
    %vm81 = vmxor %vm73, 1
    %vm82 = vmxor %vm74, 1
    %vm83 = vmxor %vm75, 1
    %vm84 = vmxor %vm76, 1
    %vm85 = vmxor %vm77, 1
    %vm86 = vmxor %vm78, 1
    %vm87 = vmxor %vm79, 1
    %v88 = vsel %vm80, %v57, 0.0
    %v89 = vsel %vm81, %v59, 0.0
    %v90 = vsel %vm82, %v61, 0.0
    %v91 = vsel %vm83, %v63, 0.0
    %v92 = vsel %vm84, %v65, 0.0
    %v93 = vsel %vm85, %v67, 0.0
    %v94 = vsel %vm86, %v69, 0.0
    %v95 = vsel %vm87, %v71, 0.0
    %v96 = vmul.f32 %v23, %v88
    %v97 = vmul.f32 %v24, %v89
    %v98 = vmul.f32 %v25, %v90
    %v99 = vmul.f32 %v26, %v91
    %v100 = vmul.f32 %v27, %v92
    %v101 = vmul.f32 %v28, %v93
    %v102 = vmul.f32 %v29, %v94
    %v103 = vmul.f32 %v30, %v95
    %104 = vst.msk [vmem:[#allocation5] sm:$0xff] %vm31, %v96
    %105 = vst.msk [vmem:[#allocation5 + $0x8] sm:$0xff] %vm31, %v97
    %106 = vst.msk [vmem:[#allocation5 + $0x10] sm:$0xff] %vm31, %v98
    %107 = vst.msk [vmem:[#allocation5 + $0x18] sm:$0xff] %vm31, %v99
    %108 = vst.msk [vmem:[#allocation5 + $0x20] sm:$0xff] %vm31, %v100
    %109 = vst.msk [vmem:[#allocation5 + $0x28] sm:$0xff] %vm31, %v101
    %110 = vst.msk [vmem:[#allocation5 + $0x30] sm:$0xff] %vm31, %v102
    %111 = vst.msk [vmem:[#allocation5 + $0x38] sm:$0xff] %vm31, %v103
    // Predicated region
    $region10: #{normalize_one.1} parent=1 // pred_check
      _
    $region11: #{normalize_one.1} parent=1 // pred_check_branch
      %113 = sbr.rel (0) target = $region13
    $region12: #{normalize_one.1} parent=1 // pred_region
      %s115 = ssub.s32 1024, 1024
      %116 = vsyncadd [#allocation4], %s115
      %s117 = sshll.u32 [#allocation5], 4
      %s118 = int_to_ptr.vmem [resolvable:$true] %s117
      %123 = dma.vmem_to_hbm [thread:$0]  %s118, 1024, %s1, [#allocation4], 128, 128, 8
    $region13: #{normalize_one.1} parent=1 // pred_fallthru
      _
    // Predicated region
    $region14: #{normalize_one.1} parent=1 // pred_check
      _
    $region15: #{normalize_one.1} parent=1 // pred_check_branch
      %125 = sbr.rel (0) target = $region17
    $region16: #{normalize_one.1} parent=1 // pred_region
      %126 = dma.done [#allocation4], 1024
    $region17: #{normalize_one.1} parent=1 // pred_fallthru
      _
    %127 = vsyncpa [#allocation3], 1
    %128 = vsyncpa [#allocation4], 1

</llo_original>
